<compile_context>
chip_gen: v6e
topology: v6e:2x2x1
jax: 0.10.0
libtpu: 0.0.40
codegen_flags: <defaults>
</compile_context>

<pallas_src>
import functools

import jax
import jax.numpy as jnp
from jax.experimental import pallas as pl
from jax.experimental.pallas import tpu as pltpu


def _pooler_kernel(x_ref, wt_ref, b_ref, o_ref):
    # x_ref:  (TB, Hp)  activations tile (input dtype)
    # wt_ref: (Hp, TN)  weight, pre-transposed to [H_in, H_out] (matmul dtype)
    # b_ref:  (1, TN)   bias tile (f32)
    # o_ref:  (TB, TN)  output tile
    x = x_ref[...].astype(wt_ref.dtype)  # explicit cast -> native bf16 MXU path
    y = jnp.dot(x, wt_ref[...], preferred_element_type=jnp.float32)
    y = y + b_ref[...].astype(jnp.float32)
    o_ref[...] = jnp.tanh(y).astype(o_ref.dtype)


@functools.partial(jax.jit, static_argnames=("block_b", "block_n", "matmul_dtype"))
def bert_pooler(hidden_states, weight, bias, *, block_b=512, block_n=512,
                matmul_dtype=jnp.bfloat16):
    """BertPooler forward: tanh(hidden_states @ weight.T + bias).

    hidden_states: (B, H)
    weight:        (H, H)  PyTorch nn.Linear layout [out_features, in_features]
    bias:          (H,)
    """
    B, H = hidden_states.shape
    out_dtype = hidden_states.dtype

    # Lane-dense padding of H up to a multiple of 128 (no-op for BERT 768/1024).
    Hp = max(128, pl.cdiv(H, 128) * 128)

    # Row tile: multiple of 16 (dense sublane packing for bf16), capped at block_b.
    TB = min(block_b, max(16, pl.cdiv(B, 16) * 16))
    TB = max(16, (TB // 16) * 16)
    Bp = pl.cdiv(B, TB) * TB

    # N (H_out) tile: multiple of 128 that divides Hp, capped at block_n.
    TN = max(128, (min(block_n, Hp) // 128) * 128)
    while Hp % TN != 0:
        TN -= 128

    # One-time weight transpose + bf16 cast (ideally done at param-load time).
    # TODO(synk): if params are stored pre-transposed / pre-cast, skip this.
    wt = weight.T.astype(matmul_dtype)           # [H_in, H_out]
    b = bias.astype(jnp.float32)
    if Hp != H:
        wt = jnp.pad(wt, ((0, Hp - H), (0, Hp - H)))
        b = jnp.pad(b, (0, Hp - H))
    b2d = b.reshape(1, Hp)

    x = hidden_states
    if (Bp, Hp) != (B, H):
        x = jnp.pad(x, ((0, Bp - B), (0, Hp - H)))

    x_item = jnp.dtype(x.dtype).itemsize
    w_item = jnp.dtype(matmul_dtype).itemsize
    o_item = jnp.dtype(out_dtype).itemsize

    # VMEM budget from the actual double-buffered working set + headroom.
    vmem_est = (2 * TB * Hp * x_item      # x tiles (double-buffered)
                + 2 * Hp * TN * w_item    # streamed weight tiles
                + 2 * TN * 4              # bias tiles
                + 2 * TB * TN * o_item)   # out tiles
    vmem_limit = int(min(max(2 * vmem_est, 16 << 20), 64 << 20))

    n_b = Bp // TB
    n_n = Hp // TN
    grid = (n_b, n_n)  # N innermost: x tile resident across the weight N-tiles

    out = pl.pallas_call(
        _pooler_kernel,
        out_shape=jax.ShapeDtypeStruct((Bp, Hp), out_dtype),
        grid=grid,
        in_specs=[
            pl.BlockSpec((TB, Hp), lambda i, j: (i, 0)),   # x: per batch tile
            pl.BlockSpec((Hp, TN), lambda i, j: (0, j)),   # w^T: streamed N tiles
            pl.BlockSpec((1, TN), lambda i, j: (0, j)),    # bias tile
        ],
        out_specs=pl.BlockSpec((TB, TN), lambda i, j: (i, j)),
        compiler_params=pltpu.CompilerParams(
            dimension_semantics=("parallel", "parallel"),  # megacore can split N
            vmem_limit_bytes=vmem_limit,
        ),
        cost_estimate=pl.CostEstimate(
            flops=2 * Bp * Hp * Hp,
            transcendentals=Bp * Hp,
            bytes_accessed=(Bp * Hp * x_item          # x read once per batch tile
                            + n_b * Hp * Hp * w_item  # weight streamed per batch tile
                            + Hp * 4                  # bias
                            + Bp * Hp * o_item),      # output
        ),
    )(x, wt, b2d)

    return out[:B, :H]


if __name__ == "__main__":
    batch, hidden = 8, 32
    key = jax.random.PRNGKey(0)
    k_x, k_w, k_b = jax.random.split(key, 3)

    # Deterministic synthetic params (nn.Linear(hidden, hidden) shapes).
    x = jax.random.normal(k_x, (batch, hidden), dtype=jnp.float32)
    weight = jax.random.normal(k_w, (hidden, hidden), dtype=jnp.float32) * 0.02
    bias = jax.random.normal(k_b, (hidden,), dtype=jnp.float32) * 0.02

    out = jax.block_until_ready(bert_pooler(x, weight, bias))
    assert out.shape == (batch, hidden)

    # Reference with the same bf16 matmul / f32 accumulate semantics.
    ref_bf16 = jnp.tanh(
        jnp.dot(x.astype(jnp.bfloat16), weight.T.astype(jnp.bfloat16),
                preferred_element_type=jnp.float32) + bias)
    assert jnp.allclose(out, ref_bf16, atol=1e-4, rtol=1e-4)

    # Loose sanity check against the full-f32 reference (nn.Linear + Tanh).
    ref_f32 = jnp.tanh(x @ weight.T + bias)
    assert jnp.allclose(out, ref_f32, atol=5e-2, rtol=5e-2)

    print("KERNEL_OK")
</pallas_src>

<mosaic_0001>
module attributes {stable_mosaic.version = 11 : i64} {
  func.func @_pooler_kernel(%arg0: i32, %arg1: i32, %arg2: memref<16x128xf32, #tpu.memory_space<vmem>>, %arg3: memref<128x128xbf16, #tpu.memory_space<vmem>>, %arg4: memref<1x128xf32, #tpu.memory_space<vmem>>, %arg5: memref<16x128xf32, #tpu.memory_space<vmem>>) attributes {dimension_semantics = [#tpu.dimension_semantics<parallel>, #tpu.dimension_semantics<parallel>], iteration_bounds = array<i64: 1, 1>, scalar_prefetch = 0 : i64, scratch_operands = 0 : i64, tpu.core_type = #tpu.core_type<tc>, window_params = [{transform_indices = @transform_0, window_bounds = array<i64: 16, 128>}, {transform_indices = @transform_1, window_bounds = array<i64: 128, 128>}, {transform_indices = @transform_2, window_bounds = array<i64: 1, 128>}, {transform_indices = @transform_3, window_bounds = array<i64: 16, 128>}]} {
    %c0 = arith.constant 0 : index
    %c0_0 = arith.constant 0 : index
    %0 = vector.load %arg2[%c0, %c0_0] : memref<16x128xf32, #tpu.memory_space<vmem>>, vector<16x128xf32>
    %1 = arith.truncf %0 : vector<16x128xf32> to vector<16x128xbf16>
    %c0_1 = arith.constant 0 : index
    %c0_2 = arith.constant 0 : index
    %2 = vector.load %arg3[%c0_1, %c0_2] : memref<128x128xbf16, #tpu.memory_space<vmem>>, vector<128x128xbf16>
    %cst = arith.constant dense<0.000000e+00> : vector<16x128xf32>
    %3 = tpu.matmul %1, %2, %cst {dimension_numbers = #tpu.dot_dimension_numbers<[1], [0], [0], [1], [0, 0, 1, 1], [], []>} : vector<16x128xbf16>, vector<128x128xbf16>, vector<16x128xf32> -> vector<16x128xf32>
    %c0_3 = arith.constant 0 : index
    %c0_4 = arith.constant 0 : index
    %4 = vector.load %arg4[%c0_3, %c0_4] : memref<1x128xf32, #tpu.memory_space<vmem>>, vector<1x128xf32>
    %5 = vector.broadcast %4 : vector<1x128xf32> to vector<16x128xf32>
    %6 = arith.addf %3, %5 : vector<16x128xf32>
    %7 = math.tanh %6 : vector<16x128xf32>
    %c0_5 = arith.constant 0 : index
    %c0_6 = arith.constant 0 : index
    %8 = vector.load %arg5[%c0_5, %c0_6] : memref<16x128xf32, #tpu.memory_space<vmem>>, vector<16x128xf32>
    tpu.vector_store %arg5[%c0_5, %c0_6], %7 {strides = array<i32>} : memref<16x128xf32, #tpu.memory_space<vmem>>, vector<16x128xf32>,
    return
  }
  func.func @transform_0(%arg0: i32, %arg1: i32) -> (i32, i32) {
    %c0_i32 = arith.constant 0 : i32
    %c0_i32_0 = arith.constant 0 : i32
    return %arg0, %c0_i32 : i32, i32
  }
  func.func @transform_1(%arg0: i32, %arg1: i32) -> (i32, i32) {
    %c0_i32 = arith.constant 0 : i32
    %c0_i32_0 = arith.constant 0 : i32
    return %c0_i32, %arg1 : i32, i32
  }
  func.func @transform_2(%arg0: i32, %arg1: i32) -> (i32, i32) {
    %c0_i32 = arith.constant 0 : i32
    %c0_i32_0 = arith.constant 0 : i32
    return %c0_i32, %arg1 : i32, i32
  }
  func.func @transform_3(%arg0: i32, %arg1: i32) -> (i32, i32) {
    %c0_i32 = arith.constant 0 : i32
    return %arg0, %arg1 : i32, i32
  }
}

</mosaic_0001>

<llo_original>
// kernel: bert_pooler.1
$region0: #{bert_pooler.1}
  #allocation0 [shape = 'u32[]', space=smem, size = 0x4, offset = 0x4, fixed_abs, tag = 'smem constant byte address 0x4 - core index']
  #allocation1 [shape = 'u32[144,128]{1,0:T(1,128)}', space=vmem, size = 0x12000, scoped, tag = 'internal scratch']
  %s0 = inlined_call_operand.vmem [shape: f32[16,128], index: 0, kind: input, shape index: {}]
  %s1 = inlined_call_operand.vmem [shape: bf16[128,128], index: 1, kind: input, shape index: {}]
  %s2 = inlined_call_operand.vmem [shape: f32[1,128], index: 2, kind: input, shape index: {}]
  %s3 = inlined_call_operand.vmem [shape: f32[16,128], index: 3, kind: output, shape index: {}]
  %s4 = sld [smem:[#allocation0]]
  $region22: #{bert_pooler.1} parent=0
    _
  %s6 = ssub.s32 1, %s4
  %s7 = scalar_select 0, %s6, %s4
  // Predicated region
  $region2: #{bert_pooler.1} parent=0 // pred_check
    _
  $region3: #{bert_pooler.1} parent=0 // pred_check_branch
    %9 = sbr.rel (0) target = $region5
  $region4: #{bert_pooler.1} parent=0 // pred_region
    _
  $region5: #{bert_pooler.1} parent=0 // pred_fallthru
    _
  // Predicated region
  $region6: #{bert_pooler.1} parent=0 // pred_check
    _
  $region7: #{bert_pooler.1} parent=0 // pred_check_branch
    %11 = sbr.rel (0) target = $region9
  $region8: #{bert_pooler.1} parent=0 // pred_region
    _
  $region9: #{bert_pooler.1} parent=0 // pred_fallthru
    _
  // Predicated region
  $region10: #{bert_pooler.1} parent=0 // pred_check
    _
  $region11: #{bert_pooler.1} parent=0 // pred_check_branch
    %13 = sbr.rel (0) target = $region13
  $region12: #{bert_pooler.1} parent=0 // pred_region
    _
  $region13: #{bert_pooler.1} parent=0 // pred_fallthru
    _
  %v15 = vld [vmem:[%s0] sm:$0xff]
  %v16 = vld [vmem:[%s0 + $0x8] sm:$0xff]
  %v17 = vpack.c.bf16 %v16, %v15
  %v18 = vld [vmem:[%s1] sm:$0xf]
  %v19 = vld [vmem:[%s1 + $0x4] sm:$0xf]
  %v20 = vld [vmem:[%s1 + $0x8] sm:$0xf]
  %v21 = vld [vmem:[%s1 + $0xc] sm:$0xf]
  %v22 = vld [vmem:[%s1 + $0x10] sm:$0xf]
  %v23 = vld [vmem:[%s1 + $0x14] sm:$0xf]
  %v24 = vld [vmem:[%s1 + $0x18] sm:$0xf]
  %v25 = vld [vmem:[%s1 + $0x1c] sm:$0xf]
  %v26 = vld [vmem:[%s1 + $0x20] sm:$0xf]
  %v27 = vld [vmem:[%s1 + $0x24] sm:$0xf]
  %v28 = vld [vmem:[%s1 + $0x28] sm:$0xf]
  %v29 = vld [vmem:[%s1 + $0x2c] sm:$0xf]
  %v30 = vld [vmem:[%s1 + $0x30] sm:$0xf]
  %v31 = vld [vmem:[%s1 + $0x34] sm:$0xf]
  %v32 = vld [vmem:[%s1 + $0x38] sm:$0xf]
  %v33 = vld [vmem:[%s1 + $0x3c] sm:$0xf]
  %v34 = vld [vmem:[%s2] sm:$0x1]
  %v36 = vlaneseq
  %v37 = vshrl.u32 %v36, 7
  %v38 = vsub.s32 0, %v37
  %v39 = vrot.slane %v34, %v38
  %v57 = vunpack.c.l.b16 %v18
  %v58 = vunpack.c.l.b16 %v19
  %v59 = vunpack.c.l.b16 %v20
  %v60 = vunpack.c.l.b16 %v21
  %v61 = vunpack.c.l.b16 %v22
  %v62 = vunpack.c.l.b16 %v23
  %v63 = vunpack.c.l.b16 %v24
  %v64 = vunpack.c.l.b16 %v25
  %v65 = vunpack.c.l.b16 %v26
  %v66 = vunpack.c.l.b16 %v27
  %v67 = vunpack.c.l.b16 %v28
  %v68 = vunpack.c.l.b16 %v29
  %v69 = vunpack.c.l.b16 %v30
  %v70 = vunpack.c.l.b16 %v31
  %v71 = vunpack.c.l.b16 %v32
  %v72 = vunpack.c.l.b16 %v33
  %v73 = vpack.c.b16 %v58, %v57
  %v74 = vpack.c.b16 %v60, %v59
  %v75 = vpack.c.b16 %v62, %v61
  %v76 = vpack.c.b16 %v64, %v63
  %v77 = vpack.c.b16 %v66, %v65
  %v78 = vpack.c.b16 %v68, %v67
  %v79 = vpack.c.b16 %v70, %v69
  %v80 = vpack.c.b16 %v72, %v71
  %89 = vmatprep.subr.bf16.mxu0 0
  %90 = vmatpush1.bf16.msra.mxu0 %v80
  %91 = vmatprep.subr.bf16.mxu0 0
  %92 = vmatpush1.bf16.msra.mxu0 %v79
  %93 = vmatprep.subr.bf16.mxu0 0
  %94 = vmatpush1.bf16.msra.mxu0 %v78
  %95 = vmatprep.subr.bf16.mxu0 0
  %96 = vmatpush1.bf16.msra.mxu0 %v77
  %97 = vmatprep.subr.bf16.mxu0 0
  %98 = vmatpush1.bf16.msra.mxu0 %v76
  %99 = vmatprep.subr.bf16.mxu0 0
  %100 = vmatpush1.bf16.msra.mxu0 %v75
  %101 = vmatprep.subr.bf16.mxu0 0
  %102 = vmatpush1.bf16.msra.mxu0 %v74
  %103 = vmatprep.subr.bf16.mxu0 0
  %104 = vmatpush1.bf16.msra.mxu0 %v73
  %105 = vmatprep.subr.bf16.mxu0 0
  %106 = vmatpush2.bf16.msra.mxu0 0
  %107 = vmatprep.subr.bf16.mxu0 0
  %108 = vmatpush2.bf16.msra.mxu0 0
  %109 = vmatprep.subr.bf16.mxu0 0
  %110 = vmatpush2.bf16.msra.mxu0 0
  %111 = vmatprep.subr.bf16.mxu0 0
  %112 = vmatpush2.bf16.msra.mxu0 0
  %113 = vmatprep.subr.bf16.mxu0 0
  %114 = vmatpush2.bf16.msra.mxu0 0
  %115 = vmatprep.subr.bf16.mxu0 0
  %116 = vmatpush2.bf16.msra.mxu0 0
  %117 = vmatprep.subr.bf16.mxu0 0
  %118 = vmatpush2.bf16.msra.mxu0 0
  %119 = vmatprep.subr.bf16.mxu0 0
  %120 = vmatpush2.bf16.msra.mxu0 0
  %121 = vmatprep.mubr.bf16.mxu0 0
  %122 = vmatmul.mubr.bf16.gmra.mxu0 %v17
  %v123 = vpop.f32.mrf.mxu0
  %v124 = vadd.f32 %v39, %v123
  %v125 = vpop.f32.mrf.mxu0
  %v126 = vpop.f32.mrf.mxu0
  %v127 = vadd.f32 %v39, %v126
  %v128 = vpop.f32.mrf.mxu0
  %129 = vdwg.mxu0
  %v130 = vtanh.pop %v124
  %v131 = vtanh.pop %v127
  %132 = vst [vmem:[%s3] sm:$0xff] %v130
  %133 = vst [vmem:[%s3 + $0x8] sm:$0xff] %v131
  // Predicated region
  $region14: #{bert_pooler.1} parent=0 // pred_check
    _
  $region15: #{bert_pooler.1} parent=0 // pred_check_branch
    %135 = sbr.rel (0) target = $region17
  $region16: #{bert_pooler.1} parent=0 // pred_region
    _
  $region17: #{bert_pooler.1} parent=0 // pred_fallthru
    _
  // Predicated region
  $region18: #{bert_pooler.1} parent=0 // pred_check
    _
  $region19: #{bert_pooler.1} parent=0 // pred_check_branch
    %137 = sbr.rel (0) target = $region21
  $region20: #{bert_pooler.1} parent=0 // pred_region
    _
  $region21: #{bert_pooler.1} parent=0 // pred_fallthru
    _

</llo_original>
